<compile_context>
chip_gen: v6e
topology: v6e:2x2x1
jax: 0.10.0
libtpu: 0.0.40
codegen_flags: <defaults>
</compile_context>

<pallas_src>
import functools

import jax
import jax.numpy as jnp
from jax.experimental import pallas as pl
from jax.experimental.pallas import tpu as pltpu

Z_DIM = 64
HIDDEN = 64          # must equal Z_DIM (fc2 is applied to rows of fc1's output)
KSIZE = 3
UNIT = 16
IN_CH = UNIT
OUT_CH = UNIT
FC1_OUT = IN_CH * HIDDEN                 # 1024
FC2_OUT = OUT_CH * KSIZE * KSIZE         # 144
FUSED_OUT = IN_CH * FC2_OUT              # 2304 = 18 * 128  (lane-dense)

# Batch tile for the grid over latent codes.  256 fills the MXU M dimension on
# v6e/v7x (two 128-row passes on v5e -- equally efficient) and amortizes the
# per-grid-step overhead.  VMEM: (256, 2304) f32 out tile x 2 buffers ~ 4.7 MiB
# + 288 KiB bf16 weight, far below the scoped-VMEM default on v5e/v6e/v7x.
BATCH_TILE = 256

_HI = jax.lax.Precision.HIGHEST


def _round_up(x, m):
    return (x + m - 1) // m * m


def _fused_kernel(z_ref, wf_ref, bf_ref, o_ref):
    # One MXU matmul (f32 accumulation), one VPU bias add, one unmasked
    # lane-dense store.  z arrives f32 (tiny) and is cast in-register so the
    # MXU runs its native bf16 path when wf is bf16.
    z = z_ref[...].astype(wf_ref.dtype)
    acc = jnp.dot(z, wf_ref[...], preferred_element_type=jnp.float32)
    o_ref[...] = (acc + bf_ref[...]).astype(o_ref.dtype)


def prepare_hypernet_params(w1, b1, w2, b2, weight_dtype=jnp.bfloat16):
    """Fold fc1 and the row-wise fc2 into one fused weight/bias (done once).

    out[i, o] = sum_h (z @ W1^T + b1)[i*H + h] * W2[o, h] + b2[o]
              = sum_z z[z] * Wf[z, i*144 + o] + bf[i*144 + o]
    with Wf[z, i*144+o] = sum_h W1[i*H+h, z] * W2[o, h]
         bf[i*144+o]    = sum_h b1[i*H+h]    * W2[o, h] + b2[o]
    """
    w1 = w1.astype(jnp.float32)
    w2 = w2.astype(jnp.float32)
    w1r = w1.reshape(IN_CH, HIDDEN, Z_DIM)                       # [i, h, z]
    wf = jnp.einsum("ihz,oh->zio", w1r, w2, precision=_HI)       # (Z, 16, 144)
    wf = wf.reshape(Z_DIM, FUSED_OUT)                            # (64, 2304)
    bf = (jnp.dot(b1.reshape(IN_CH, HIDDEN).astype(jnp.float32), w2.T,
                  precision=_HI)
          + b2.astype(jnp.float32)).reshape(1, FUSED_OUT)        # (1, 2304) f32
    return wf.astype(weight_dtype), bf


@functools.partial(jax.jit, static_argnames=("out_dtype",))
def hypernetwork_forward(z, wf, bf, out_dtype=jnp.float32):
    """z: (Z_DIM,) or (B, Z_DIM); wf/bf from prepare_hypernet_params.

    Returns (OUT_CH, IN_CH, K, K) for a single z, or (B, OUT_CH, IN_CH, K, K)
    for a batch of latent codes.  out_dtype=jnp.bfloat16 halves the dominant
    output writeback stream (accumulation stays f32 inside the kernel).
    """
    squeeze = z.ndim == 1
    z2d = (z.reshape(1, Z_DIM) if squeeze else z).astype(jnp.float32)
    B = z2d.shape[0]

    # One grid path for every B.  Partial last blocks (B not a multiple of the
    # tile) are clipped by Pallas: out-of-bounds input rows are unspecified but
    # only feed out-of-bounds output rows, which are never written back.
    tile = min(BATCH_TILE, _round_up(B, 8))
    grid = (pl.cdiv(B, tile),)

    out_itemsize = jnp.dtype(out_dtype).itemsize
    cost = pl.CostEstimate(
        flops=2 * B * Z_DIM * FUSED_OUT,
        transcendentals=0,
        bytes_accessed=(B * Z_DIM * 4                       # z
                        + wf.size * wf.dtype.itemsize       # fused weight
                        + bf.size * bf.dtype.itemsize       # fused bias
                        + B * FUSED_OUT * out_itemsize),    # output
    )

    out = pl.pallas_call(
        _fused_kernel,
        out_shape=jax.ShapeDtypeStruct((B, FUSED_OUT), out_dtype),
        grid=grid,
        in_specs=[
            pl.BlockSpec((tile, Z_DIM), lambda i: (i, 0)),
            # Constant index_map -> weight/bias stay VMEM-resident across the
            # whole grid (re-DMA'd at most once per TensorCore on v7x).
            pl.BlockSpec((Z_DIM, FUSED_OUT), lambda i: (0, 0)),
            pl.BlockSpec((1, FUSED_OUT), lambda i: (0, 0)),
        ],
        out_specs=pl.BlockSpec((tile, FUSED_OUT), lambda i: (i, 0)),
        compiler_params=pltpu.CompilerParams(
            dimension_semantics=("parallel",)),
        cost_estimate=cost,
    )(z2d, wf, bf)

    # Glue reshape: flat column order is i*144 + (oc*9 + kk), identical to the
    # PyTorch flat buffer, so .view(out_ch, in_ch, k, k) is a pure reinterpret
    # (note: like the PyTorch .view, this does NOT semantically transpose
    # in/out channel roles -- it reproduces the module's raw layout exactly).
    out = out.reshape(B, OUT_CH, IN_CH, KSIZE, KSIZE)
    return out[0] if squeeze else out


def reference_forward(z, w1, b1, w2, b2):
    """Pure-JAX mirror of the PyTorch module (f32, un-fused)."""
    h = (jnp.dot(z, w1.T, precision=_HI) + b1).reshape(IN_CH, HIDDEN)
    out = jnp.dot(h, w2.T, precision=_HI) + b2                   # (16, 144)
    return out.reshape(OUT_CH, IN_CH, KSIZE, KSIZE)


if __name__ == "__main__":
    key = jax.random.PRNGKey(0)
    kz, kzb, kzc, k1w, k1b, k2w, k2b = jax.random.split(key, 7)

    # Deterministic parameter init mirroring nn.Linear's U(-1/sqrt(fan_in), .)
    bound = 1.0 / (Z_DIM ** 0.5)
    w1 = jax.random.uniform(k1w, (FC1_OUT, Z_DIM), jnp.float32, -bound, bound)
    b1 = jax.random.uniform(k1b, (FC1_OUT,), jnp.float32, -bound, bound)
    w2 = jax.random.uniform(k2w, (FC2_OUT, Z_DIM), jnp.float32, -bound, bound)
    b2 = jax.random.uniform(k2b, (FC2_OUT,), jnp.float32, -bound, bound)

    z = jax.random.normal(kz, (Z_DIM,), jnp.float32)
    ref = reference_forward(z, w1, b1, w2, b2)
    batched_ref = jax.vmap(lambda zz: reference_forward(zz, w1, b1, w2, b2))

    wf32, bf32 = prepare_hypernet_params(w1, b1, w2, b2,
                                         weight_dtype=jnp.float32)
    wfb, bfb = prepare_hypernet_params(w1, b1, w2, b2,
                                       weight_dtype=jnp.bfloat16)

    # --- single z, f32 fused weights: tight check vs un-fused reference ---
    out_f32 = jax.block_until_ready(hypernetwork_forward(z, wf32, bf32))
    assert out_f32.shape == (OUT_CH, IN_CH, KSIZE, KSIZE), out_f32.shape
    assert jnp.allclose(out_f32, ref, rtol=1e-4, atol=1e-4), \
        f"f32 max err {jnp.max(jnp.abs(out_f32 - ref))}"

    # --- single z, bf16 fused weights (fast path; f32 acc + f32 bias) ---
    out_bf = jax.block_until_ready(hypernetwork_forward(z, wfb, bfb))
    assert jnp.allclose(out_bf, ref, rtol=2e-2, atol=2e-2), \
        f"bf16-weight max err {jnp.max(jnp.abs(out_bf - ref))}"

    # --- single z, bf16 weights AND bf16 output (halved writeback stream) ---
    out_bf16o = jax.block_until_ready(
        hypernetwork_forward(z, wfb, bfb, out_dtype=jnp.bfloat16))
    assert out_bf16o.dtype == jnp.bfloat16
    assert jnp.allclose(out_bf16o.astype(jnp.float32), ref,
                        rtol=2e-2, atol=2e-2), \
        f"bf16-out max err {jnp.max(jnp.abs(out_bf16o.astype(jnp.float32) - ref))}"

    # --- batched, B = 512: two 256-row grid steps ('parallel' -> megacore) ---
    B1 = 2 * BATCH_TILE
    zb = jax.random.normal(kzb, (B1, Z_DIM), jnp.float32)
    out_b = jax.block_until_ready(hypernetwork_forward(zb, wfb, bfb))
    ref_b = batched_ref(zb)
    assert out_b.shape == (B1, OUT_CH, IN_CH, KSIZE, KSIZE), out_b.shape
    assert jnp.allclose(out_b, ref_b, rtol=2e-2, atol=2e-2), \
        f"batched bf16 max err {jnp.max(jnp.abs(out_b - ref_b))}"

    # --- batched, B = 300: exercises the clipped partial last block (f32,
    #     tight tolerance, proves the masked writeback is exact) ---
    B2 = 300
    zc = jax.random.normal(kzc, (B2, Z_DIM), jnp.float32)
    out_c = jax.block_until_ready(hypernetwork_forward(zc, wf32, bf32))
    ref_c = batched_ref(zc)
    assert out_c.shape == (B2, OUT_CH, IN_CH, KSIZE, KSIZE), out_c.shape
    assert jnp.allclose(out_c, ref_c, rtol=1e-4, atol=1e-4), \
        f"partial-block f32 max err {jnp.max(jnp.abs(out_c - ref_c))}"

    print("KERNEL_OK")
</pallas_src>

<mosaic_0001>
module attributes {stable_mosaic.version = 11 : i64} {
  func.func @_fused_kernel(%arg0: i32, %arg1: memref<8x64xf32, #tpu.memory_space<vmem>>, %arg2: memref<64x2304xf32, #tpu.memory_space<vmem>>, %arg3: memref<1x2304xf32, #tpu.memory_space<vmem>>, %arg4: memref<8x2304xf32, #tpu.memory_space<vmem>>) attributes {dimension_semantics = [#tpu.dimension_semantics<parallel>], iteration_bounds = array<i64: 1>, scalar_prefetch = 0 : i64, scratch_operands = 0 : i64, tpu.core_type = #tpu.core_type<tc>, window_params = [{transform_indices = @transform_0, window_bounds = array<i64: 8, 64>}, {pipeline_mode = #tpu.pipeline_mode<synchronous>, transform_indices = @transform_1, window_bounds = array<i64: 64, 2304>}, {pipeline_mode = #tpu.pipeline_mode<synchronous>, transform_indices = @transform_2, window_bounds = array<i64: 1, 2304>}, {transform_indices = @transform_3, window_bounds = array<i64: 8, 2304>}]} {
    %c0 = arith.constant 0 : index
    %c0_0 = arith.constant 0 : index
    %0 = vector.load %arg1[%c0, %c0_0] : memref<8x64xf32, #tpu.memory_space<vmem>>, vector<8x64xf32>
    %c0_1 = arith.constant 0 : index
    %c0_2 = arith.constant 0 : index
    %1 = vector.load %arg2[%c0_1, %c0_2] : memref<64x2304xf32, #tpu.memory_space<vmem>>, vector<64x2304xf32>
    %cst = arith.constant dense<0.000000e+00> : vector<8x2304xf32>
    %2 = tpu.matmul %0, %1, %cst {dimension_numbers = #tpu.dot_dimension_numbers<[1], [0], [0], [1], [0, 0, 1, 1], [], []>} : vector<8x64xf32>, vector<64x2304xf32>, vector<8x2304xf32> -> vector<8x2304xf32>
    %c0_3 = arith.constant 0 : index
    %c0_4 = arith.constant 0 : index
    %3 = vector.load %arg3[%c0_3, %c0_4] : memref<1x2304xf32, #tpu.memory_space<vmem>>, vector<1x2304xf32>
    %4 = vector.broadcast %3 : vector<1x2304xf32> to vector<8x2304xf32>
    %5 = arith.addf %2, %4 : vector<8x2304xf32>
    %c0_5 = arith.constant 0 : index
    %c0_6 = arith.constant 0 : index
    %6 = vector.load %arg4[%c0_5, %c0_6] : memref<8x2304xf32, #tpu.memory_space<vmem>>, vector<8x2304xf32>
    tpu.vector_store %arg4[%c0_5, %c0_6], %5 {strides = array<i32>} : memref<8x2304xf32, #tpu.memory_space<vmem>>, vector<8x2304xf32>,
    return
  }
  func.func @transform_0(%arg0: i32) -> (i32, i32) {
    %c0_i32 = arith.constant 0 : i32
    %c0_i32_0 = arith.constant 0 : i32
    return %arg0, %c0_i32 : i32, i32
  }
  func.func @transform_1(%arg0: i32) -> (i32, i32) {
    %c0_i32 = arith.constant 0 : i32
    %c0_i32_0 = arith.constant 0 : i32
    %c0_i32_1 = arith.constant 0 : i32
    return %c0_i32, %c0_i32_0 : i32, i32
  }
  func.func @transform_2(%arg0: i32) -> (i32, i32) {
    %c0_i32 = arith.constant 0 : i32
    %c0_i32_0 = arith.constant 0 : i32
    %c0_i32_1 = arith.constant 0 : i32
    return %c0_i32, %c0_i32_0 : i32, i32
  }
  func.func @transform_3(%arg0: i32) -> (i32, i32) {
    %c0_i32 = arith.constant 0 : i32
    %c0_i32_0 = arith.constant 0 : i32
    return %arg0, %c0_i32 : i32, i32
  }
}

</mosaic_0001>

<llo_original>
// kernel: hypernetwork_forward.1
$region0: #{hypernetwork_forward.1}
  #allocation0 [shape = 'u32[]', space=smem, size = 0x4, offset = 0x4, fixed_abs, tag = 'smem constant byte address 0x4 - core index']
  #allocation1 [shape = 'u32[144,128]{1,0:T(1,128)}', space=vmem, size = 0x12000, scoped, tag = 'internal scratch']
  %s0 = inlined_call_operand.vmem [shape: f32[1,64], index: 0, kind: input, shape index: {}]
  %s1 = inlined_call_operand.hbm [shape: f32[64,2304], index: 1, kind: input, shape index: {}]
  %s2 = inlined_call_operand.hbm [shape: f32[1,2304], index: 2, kind: input, shape index: {}]
  %s3 = inlined_call_operand.vmem [shape: f32[1,2304], index: 3, kind: output, shape index: {}]
  %s4 = sld [smem:[#allocation0]]
  $region52: #{hypernetwork_forward.1} parent=0
    _
  %s6 = ssub.s32 1, %s4
  %s7 = scalar_select 0, %s6, %s4
  $region1: #{hypernetwork_forward.1} parent=0
    #allocation2 [shape = 'u8[589824]{0}', space=vmem, size = 0x90000, scoped, tag = 'input window, operand 1, single buffered']
    #allocation3 [shape = 's32[1]{0}', space=sflag, size = 0x4, scoped, tag = 'scoped memory for hypernetwork_forward.1']
    #allocation4 [shape = 'u8[9216]{0}', space=vmem, size = 0x2400, scoped, tag = 'input window, operand 2, single buffered']
    #allocation5 [shape = 's32[1]{0}', space=sflag, size = 0x4, scoped, tag = 'scoped memory for hypernetwork_forward.1']
    #allocation6 [shape = 'u8[73728]{0}', space=vmem, size = 0x12000, scoped, tag = 'output window, operand 0, single buffered']
    %8 = vsyncpa [#allocation3], 0
    %9 = vsyncpa [#allocation5], 0
    // Predicated region
    $region2: #{hypernetwork_forward.1} parent=1 // pred_check
      _
    $region3: #{hypernetwork_forward.1} parent=1 // pred_check_branch
      %11 = sbr.rel (0) target = $region5
    $region4: #{hypernetwork_forward.1} parent=1 // pred_region
      _
    $region5: #{hypernetwork_forward.1} parent=1 // pred_fallthru
      _
    // Predicated region
    $region6: #{hypernetwork_forward.1} parent=1 // pred_check
      _
    $region7: #{hypernetwork_forward.1} parent=1 // pred_check_branch
      %13 = sbr.rel (0) target = $region9
    $region8: #{hypernetwork_forward.1} parent=1 // pred_region
      %s15 = ssub.s32 18432, 18432
      %16 = vsyncadd [#allocation3], %s15
      %s17 = sshll.u32 [#allocation2], 4
      %s18 = int_to_ptr.vmem [resolvable:$true] %s17
      %23 = dma.hbm_to_vmem [thread:$0]  %s1, 18432, %s18, [#allocation3], 2304, 2304, 144
    $region9: #{hypernetwork_forward.1} parent=1 // pred_fallthru
      _
    // Predicated region
    $region10: #{hypernetwork_forward.1} parent=1 // pred_check
      _
    $region11: #{hypernetwork_forward.1} parent=1 // pred_check_branch
      %25 = sbr.rel (0) target = $region13
    $region12: #{hypernetwork_forward.1} parent=1 // pred_region
      %s27 = ssub.s32 288, 288
      %28 = vsyncadd [#allocation5], %s27
      %s30 = sshll.u32 [#allocation4], 4
      %s31 = int_to_ptr.vmem [resolvable:$true] %s30
      %33 = dma.hbm_to_vmem [thread:$0]  %s2, 288, %s31, [#allocation5]
    $region13: #{hypernetwork_forward.1} parent=1 // pred_fallthru
      _
    // Predicated region
    $region14: #{hypernetwork_forward.1} parent=1 // pred_check
      _
    $region15: #{hypernetwork_forward.1} parent=1 // pred_check_branch
      %35 = sbr.rel (0) target = $region17
    $region16: #{hypernetwork_forward.1} parent=1 // pred_region
      %36 = dma.done [#allocation3], 18432
    $region17: #{hypernetwork_forward.1} parent=1 // pred_fallthru
      _
    // Predicated region
    $region18: #{hypernetwork_forward.1} parent=1 // pred_check
      _
    $region19: #{hypernetwork_forward.1} parent=1 // pred_check_branch
      %38 = sbr.rel (0) target = $region21
    $region20: #{hypernetwork_forward.1} parent=1 // pred_region
      %39 = dma.done [#allocation5], 288
    $region21: #{hypernetwork_forward.1} parent=1 // pred_fallthru
      _
    %v40 = vld [vmem:[%s0] sm:$0xff]
    %v41 = vld [vmem:[#allocation2] sm:$0xff]
    %v42 = vld [vmem:[#allocation2 + $0x8] sm:$0xff]
    %v43 = vld [vmem:[#allocation2 + $0x10] sm:$0xff]
    %v44 = vld [vmem:[#allocation2 + $0x18] sm:$0xff]
    %v45 = vld [vmem:[#allocation2 + $0x20] sm:$0xff]
    %v46 = vld [vmem:[#allocation2 + $0x28] sm:$0xff]
    %v47 = vld [vmem:[#allocation2 + $0x30] sm:$0xff]
    %v48 = vld [vmem:[#allocation2 + $0x38] sm:$0xff]
    %v49 = vld [vmem:[#allocation2 + $0x40] sm:$0xff]
    %v50 = vld [vmem:[#allocation2 + $0x48] sm:$0xff]
    %v51 = vld [vmem:[#allocation2 + $0x50] sm:$0xff]
    %v52 = vld [vmem:[#allocation2 + $0x58] sm:$0xff]
    %v53 = vld [vmem:[#allocation2 + $0x60] sm:$0xff]
    %v54 = vld [vmem:[#allocation2 + $0x68] sm:$0xff]
    %v55 = vld [vmem:[#allocation2 + $0x70] sm:$0xff]
    %v56 = vld [vmem:[#allocation2 + $0x78] sm:$0xff]
    %v57 = vld [vmem:[#allocation2 + $0x80] sm:$0xff]
    %v58 = vld [vmem:[#allocation2 + $0x88] sm:$0xff]
    %v59 = vld [vmem:[#allocation2 + $0x90] sm:$0xff]
    %v60 = vld [vmem:[#allocation2 + $0x98] sm:$0xff]
    %v61 = vld [vmem:[#allocation2 + $0xa0] sm:$0xff]
    %v62 = vld [vmem:[#allocation2 + $0xa8] sm:$0xff]
    %v63 = vld [vmem:[#allocation2 + $0xb0] sm:$0xff]
    %v64 = vld [vmem:[#allocation2 + $0xb8] sm:$0xff]
    %v65 = vld [vmem:[#allocation2 + $0xc0] sm:$0xff]
    %v66 = vld [vmem:[#allocation2 + $0xc8] sm:$0xff]
    %v67 = vld [vmem:[#allocation2 + $0xd0] sm:$0xff]
    %v68 = vld [vmem:[#allocation2 + $0xd8] sm:$0xff]
    %v69 = vld [vmem:[#allocation2 + $0xe0] sm:$0xff]
    %v70 = vld [vmem:[#allocation2 + $0xe8] sm:$0xff]
    %v71 = vld [vmem:[#allocation2 + $0xf0] sm:$0xff]
    %v72 = vld [vmem:[#allocation2 + $0xf8] sm:$0xff]
    %v73 = vld [vmem:[#allocation2 + $0x100] sm:$0xff]
    %v74 = vld [vmem:[#allocation2 + $0x108] sm:$0xff]
    %v75 = vld [vmem:[#allocation2 + $0x110] sm:$0xff]
    %v76 = vld [vmem:[#allocation2 + $0x118] sm:$0xff]
    %v77 = vld [vmem:[#allocation2 + $0x120] sm:$0xff]
    %v78 = vld [vmem:[#allocation2 + $0x128] sm:$0xff]
    %v79 = vld [vmem:[#allocation2 + $0x130] sm:$0xff]
    %v80 = vld [vmem:[#allocation2 + $0x138] sm:$0xff]
    %v81 = vld [vmem:[#allocation2 + $0x140] sm:$0xff]
    %v82 = vld [vmem:[#allocation2 + $0x148] sm:$0xff]
    %v83 = vld [vmem:[#allocation2 + $0x150] sm:$0xff]
    %v84 = vld [vmem:[#allocation2 + $0x158] sm:$0xff]
    %v85 = vld [vmem:[#allocation2 + $0x160] sm:$0xff]
    %v86 = vld [vmem:[#allocation2 + $0x168] sm:$0xff]
    %v87 = vld [vmem:[#allocation2 + $0x170] sm:$0xff]
    %v88 = vld [vmem:[#allocation2 + $0x178] sm:$0xff]
    %v89 = vld [vmem:[#allocation2 + $0x180] sm:$0xff]
    %v90 = vld [vmem:[#allocation2 + $0x188] sm:$0xff]
    %v91 = vld [vmem:[#allocation2 + $0x190] sm:$0xff]
    %v92 = vld [vmem:[#allocation2 + $0x198] sm:$0xff]
    %v93 = vld [vmem:[#allocation2 + $0x1a0] sm:$0xff]
    %v94 = vld [vmem:[#allocation2 + $0x1a8] sm:$0xff]
    %v95 = vld [vmem:[#allocation2 + $0x1b0] sm:$0xff]
    %v96 = vld [vmem:[#allocation2 + $0x1b8] sm:$0xff]
    %v97 = vld [vmem:[#allocation2 + $0x1c0] sm:$0xff]
    %v98 = vld [vmem:[#allocation2 + $0x1c8] sm:$0xff]
    %v99 = vld [vmem:[#allocation2 + $0x1d0] sm:$0xff]
    %v100 = vld [vmem:[#allocation2 + $0x1d8] sm:$0xff]
    %v101 = vld [vmem:[#allocation2 + $0x1e0] sm:$0xff]
    %v102 = vld [vmem:[#allocation2 + $0x1e8] sm:$0xff]
    %v103 = vld [vmem:[#allocation2 + $0x1f0] sm:$0xff]
    %v104 = vld [vmem:[#allocation2 + $0x1f8] sm:$0xff]
    %v105 = vld [vmem:[#allocation2 + $0x200] sm:$0xff]
    %v106 = vld [vmem:[#allocation2 + $0x208] sm:$0xff]
    %v107 = vld [vmem:[#allocation2 + $0x210] sm:$0xff]
    %v108 = vld [vmem:[#allocation2 + $0x218] sm:$0xff]
    %v109 = vld [vmem:[#allocation2 + $0x220] sm:$0xff]
    %v110 = vld [vmem:[#allocation2 + $0x228] sm:$0xff]
    %v111 = vld [vmem:[#allocation2 + $0x230] sm:$0xff]
    %v112 = vld [vmem:[#allocation2 + $0x238] sm:$0xff]
    %v113 = vld [vmem:[#allocation2 + $0x240] sm:$0xff]
    %v114 = vld [vmem:[#allocation2 + $0x248] sm:$0xff]
    %v115 = vld [vmem:[#allocation2 + $0x250] sm:$0xff]
    %v116 = vld [vmem:[#allocation2 + $0x258] sm:$0xff]
    %v117 = vld [vmem:[#allocation2 + $0x260] sm:$0xff]
    %v118 = vld [vmem:[#allocation2 + $0x268] sm:$0xff]
    %v119 = vld [vmem:[#allocation2 + $0x270] sm:$0xff]
    %v120 = vld [vmem:[#allocation2 + $0x278] sm:$0xff]
    %v121 = vld [vmem:[#allocation2 + $0x280] sm:$0xff]
    %v122 = vld [vmem:[#allocation2 + $0x288] sm:$0xff]
    %v123 = vld [vmem:[#allocation2 + $0x290] sm:$0xff]
    %v124 = vld [vmem:[#allocation2 + $0x298] sm:$0xff]
    %v125 = vld [vmem:[#allocation2 + $0x2a0] sm:$0xff]
    %v126 = vld [vmem:[#allocation2 + $0x2a8] sm:$0xff]
    %v127 = vld [vmem:[#allocation2 + $0x2b0] sm:$0xff]
    %v128 = vld [vmem:[#allocation2 + $0x2b8] sm:$0xff]
    %v129 = vld [vmem:[#allocation2 + $0x2c0] sm:$0xff]
    %v130 = vld [vmem:[#allocation2 + $0x2c8] sm:$0xff]
    %v131 = vld [vmem:[#allocation2 + $0x2d0] sm:$0xff]
    %v132 = vld [vmem:[#allocation2 + $0x2d8] sm:$0xff]
    %v133 = vld [vmem:[#allocation2 + $0x2e0] sm:$0xff]
    %v134 = vld [vmem:[#allocation2 + $0x2e8] sm:$0xff]
    %v135 = vld [vmem:[#allocation2 + $0x2f0] sm:$0xff]
    %v136 = vld [vmem:[#allocation2 + $0x2f8] sm:$0xff]
    %v137 = vld [vmem:[#allocation2 + $0x300] sm:$0xff]
    %v138 = vld [vmem:[#allocation2 + $0x308] sm:$0xff]
    %v139 = vld [vmem:[#allocation2 + $0x310] sm:$0xff]
    %v140 = vld [vmem:[#allocation2 + $0x318] sm:$0xff]
    %v141 = vld [vmem:[#allocation2 + $0x320] sm:$0xff]
    %v142 = vld [vmem:[#allocation2 + $0x328] sm:$0xff]
    %v143 = vld [vmem:[#allocation2 + $0x330] sm:$0xff]
    %v144 = vld [vmem:[#allocation2 + $0x338] sm:$0xff]
    %v145 = vld [vmem:[#allocation2 + $0x340] sm:$0xff]
    %v146 = vld [vmem:[#allocation2 + $0x348] sm:$0xff]
    %v147 = vld [vmem:[#allocation2 + $0x350] sm:$0xff]
    %v148 = vld [vmem:[#allocation2 + $0x358] sm:$0xff]
    %v149 = vld [vmem:[#allocation2 + $0x360] sm:$0xff]
    %v150 = vld [vmem:[#allocation2 + $0x368] sm:$0xff]
    %v151 = vld [vmem:[#allocation2 + $0x370] sm:$0xff]
    %v152 = vld [vmem:[#allocation2 + $0x378] sm:$0xff]
    %v153 = vld [vmem:[#allocation2 + $0x380] sm:$0xff]
    %v154 = vld [vmem:[#allocation2 + $0x388] sm:$0xff]
    %v155 = vld [vmem:[#allocation2 + $0x390] sm:$0xff]
    %v156 = vld [vmem:[#allocation2 + $0x398] sm:$0xff]
    %v157 = vld [vmem:[#allocation2 + $0x3a0] sm:$0xff]
    %v158 = vld [vmem:[#allocation2 + $0x3a8] sm:$0xff]
    %v159 = vld [vmem:[#allocation2 + $0x3b0] sm:$0xff]
    %v160 = vld [vmem:[#allocation2 + $0x3b8] sm:$0xff]
    %v161 = vld [vmem:[#allocation2 + $0x3c0] sm:$0xff]
    %v162 = vld [vmem:[#allocation2 + $0x3c8] sm:$0xff]
    %v163 = vld [vmem:[#allocation2 + $0x3d0] sm:$0xff]
    %v164 = vld [vmem:[#allocation2 + $0x3d8] sm:$0xff]
    %v165 = vld [vmem:[#allocation2 + $0x3e0] sm:$0xff]
    %v166 = vld [vmem:[#allocation2 + $0x3e8] sm:$0xff]
    %v167 = vld [vmem:[#allocation2 + $0x3f0] sm:$0xff]
    %v168 = vld [vmem:[#allocation2 + $0x3f8] sm:$0xff]
    %v169 = vld [vmem:[#allocation2 + $0x400] sm:$0xff]
    %v170 = vld [vmem:[#allocation2 + $0x408] sm:$0xff]
    %v171 = vld [vmem:[#allocation2 + $0x410] sm:$0xff]
    %v172 = vld [vmem:[#allocation2 + $0x418] sm:$0xff]
    %v173 = vld [vmem:[#allocation2 + $0x420] sm:$0xff]
    %v174 = vld [vmem:[#allocation2 + $0x428] sm:$0xff]
    %v175 = vld [vmem:[#allocation2 + $0x430] sm:$0xff]
    %v176 = vld [vmem:[#allocation2 + $0x438] sm:$0xff]
    %v177 = vld [vmem:[#allocation2 + $0x440] sm:$0xff]
    %v178 = vld [vmem:[#allocation2 + $0x448] sm:$0xff]
    %v179 = vld [vmem:[#allocation2 + $0x450] sm:$0xff]
    %v180 = vld [vmem:[#allocation2 + $0x458] sm:$0xff]
    %v181 = vld [vmem:[#allocation2 + $0x460] sm:$0xff]
    %v182 = vld [vmem:[#allocation2 + $0x468] sm:$0xff]
    %v183 = vld [vmem:[#allocation2 + $0x470] sm:$0xff]
    %v184 = vld [vmem:[#allocation2 + $0x478] sm:$0xff]
    %v185 = vld [vmem:[#allocation4] sm:$0xff]
    %v186 = vld [vmem:[#allocation4 + $0x8] sm:$0xff]
    %v187 = vld [vmem:[#allocation4 + $0x10] sm:$0x3]
    %v191 = vlaneseq
    %v192 = vshrl.u32 %v191, 7
    %v193 = vsub.s32 0, %v192
    %v194 = vrot.slane %v185, %v193
    %v195 = vlaneseq
    %v196 = vshrl.u32 %v195, 7
    %v197 = vsub.s32 1, %v196
    %v198 = vrot.slane %v185, %v197
    %v199 = vlaneseq
    %v200 = vshrl.u32 %v199, 7
    %v201 = vsub.s32 2, %v200
    %v202 = vrot.slane %v185, %v201
    %v203 = vlaneseq
    %v204 = vshrl.u32 %v203, 7
    %v205 = vsub.s32 3, %v204
    %v206 = vrot.slane %v185, %v205
    %v207 = vlaneseq
    %v208 = vshrl.u32 %v207, 7
    %v209 = vsub.s32 4, %v208
    %v210 = vrot.slane %v185, %v209
    %v211 = vlaneseq
    %v212 = vshrl.u32 %v211, 7
    %v213 = vsub.s32 5, %v212
    %v214 = vrot.slane %v185, %v213
    %v215 = vlaneseq
    %v216 = vshrl.u32 %v215, 7
    %v217 = vsub.s32 6, %v216
    %v218 = vrot.slane %v185, %v217
    %v219 = vlaneseq
    %v220 = vshrl.u32 %v219, 7
    %v221 = vsub.s32 7, %v220
    %v222 = vrot.slane %v185, %v221
    %v223 = vlaneseq
    %v224 = vshrl.u32 %v223, 7
    %v225 = vsub.s32 0, %v224
    %v226 = vrot.slane %v186, %v225
    %v227 = vlaneseq
    %v228 = vshrl.u32 %v227, 7
    %v229 = vsub.s32 1, %v228
    %v230 = vrot.slane %v186, %v229
    %v231 = vlaneseq
    %v232 = vshrl.u32 %v231, 7
    %v233 = vsub.s32 2, %v232
    %v234 = vrot.slane %v186, %v233
    %v235 = vlaneseq
    %v236 = vshrl.u32 %v235, 7
    %v237 = vsub.s32 3, %v236
    %v238 = vrot.slane %v186, %v237
    %v239 = vlaneseq
    %v240 = vshrl.u32 %v239, 7
    %v241 = vsub.s32 4, %v240
    %v242 = vrot.slane %v186, %v241
    %v243 = vlaneseq
    %v244 = vshrl.u32 %v243, 7
    %v245 = vsub.s32 5, %v244
    %v246 = vrot.slane %v186, %v245
    %v247 = vlaneseq
    %v248 = vshrl.u32 %v247, 7
    %v249 = vsub.s32 6, %v248
    %v250 = vrot.slane %v186, %v249
    %v251 = vlaneseq
    %v252 = vshrl.u32 %v251, 7
    %v253 = vsub.s32 7, %v252
    %v254 = vrot.slane %v186, %v253
    %v255 = vlaneseq
    %v256 = vshrl.u32 %v255, 7
    %v257 = vsub.s32 0, %v256
    %v258 = vrot.slane %v187, %v257
    %v259 = vlaneseq
    %v260 = vshrl.u32 %v259, 7
    %v261 = vsub.s32 1, %v260
    %v262 = vrot.slane %v187, %v261
    %vm281 = vcmask 523264
    %v283 = vsel %vm281, %v40, 0
    %285 = vmatprep.subr.mxu0 0.0
    %286 = vmatpush1.msra.mxu0 0.0
    %287 = vmatprep.subr.mxu0 0.0
    %288 = vmatpush1.msra.mxu0 0.0
    %289 = vmatprep.subr.mxu0 0.0
    %290 = vmatpush1.msra.mxu0 0.0
    %291 = vmatprep.subr.mxu0 0.0
    %292 = vmatpush1.msra.mxu0 0.0
    %293 = vmatprep.subr.mxu0 0.0
    %294 = vmatpush1.msra.mxu0 0.0
    %295 = vmatprep.subr.mxu0 0.0
    %296 = vmatpush1.msra.mxu0 0.0
    %297 = vmatprep.subr.mxu0 0.0
    %298 = vmatpush1.msra.mxu0 0.0
    %299 = vmatprep.subr.mxu0 0.0
    %300 = vmatpush1.msra.mxu0 0.0
    %301 = vmatprep.subr.mxu0 %v168
    %302 = vmatpush1.msra.mxu0 %v167
    %303 = vmatprep.subr.mxu0 %v150
    %304 = vmatpush1.msra.mxu0 %v149
    %305 = vmatprep.subr.mxu0 %v132
    %306 = vmatpush1.msra.mxu0 %v131
    %307 = vmatprep.subr.mxu0 %v114
    %308 = vmatpush1.msra.mxu0 %v113
    %309 = vmatprep.subr.mxu0 %v96
    %310 = vmatpush1.msra.mxu0 %v95
    %311 = vmatprep.subr.mxu0 %v78
    %312 = vmatpush1.msra.mxu0 %v77
    %313 = vmatprep.subr.mxu0 %v60
    %314 = vmatpush1.msra.mxu0 %v59
    %315 = vmatprep.subr.mxu0 %v42
    %316 = vmatpush1.msra.mxu0 %v41
    %317 = vmatprep.subr.mxu0 0.0
    %318 = vmatpush2.msra.mxu0 0.0
    %319 = vmatprep.subr.mxu0 0.0
    %320 = vmatpush2.msra.mxu0 0.0
    %321 = vmatprep.subr.mxu0 0.0
    %322 = vmatpush2.msra.mxu0 0.0
    %323 = vmatprep.subr.mxu0 0.0
    %324 = vmatpush2.msra.mxu0 0.0
    %325 = vmatprep.subr.mxu0 0.0
    %326 = vmatpush2.msra.mxu0 0.0
    %327 = vmatprep.subr.mxu0 0.0
    %328 = vmatpush2.msra.mxu0 0.0
    %329 = vmatprep.subr.mxu0 0.0
    %330 = vmatpush2.msra.mxu0 0.0
    %331 = vmatprep.subr.mxu0 0.0
    %332 = vmatpush2.msra.mxu0 0.0
    %333 = vmatprep.subr.mxu0 0.0
    %334 = vmatpush2.msra.mxu0 0.0
    %335 = vmatprep.subr.mxu0 0.0
    %336 = vmatpush2.msra.mxu0 0.0
    %337 = vmatprep.subr.mxu0 0.0
    %338 = vmatpush2.msra.mxu0 0.0
    %339 = vmatprep.subr.mxu0 0.0
    %340 = vmatpush2.msra.mxu0 0.0
    %341 = vmatprep.subr.mxu0 0.0
    %342 = vmatpush2.msra.mxu0 0.0
    %343 = vmatprep.subr.mxu0 0.0
    %344 = vmatpush2.msra.mxu0 0.0
    %345 = vmatprep.subr.mxu0 0.0
    %346 = vmatpush2.msra.mxu0 0.0
    %347 = vmatprep.subr.mxu0 0.0
    %348 = vmatpush2.msra.mxu0 0.0
    %349 = vmatprep.mubr.f32.mxu0 0.0
    %350 = vmatmul.mubr.f32.gmra.mxu0 %v283
    %v351 = vpop.f32.mrf.mxu0
    %v352 = vadd.f32 %v194, %v351
    %v353 = vpop.f32.mrf.mxu0
    %v354 = vadd.f32 %v198, %v353
    %355 = vdwg.mxu0
    %356 = vmatprep.subr.mxu0 0.0
    %357 = vmatpush1.msra.mxu0 0.0
    %358 = vmatprep.subr.mxu0 0.0
    %359 = vmatpush1.msra.mxu0 0.0
    %360 = vmatprep.subr.mxu0 0.0
    %361 = vmatpush1.msra.mxu0 0.0
    %362 = vmatprep.subr.mxu0 0.0
    %363 = vmatpush1.msra.mxu0 0.0
    %364 = vmatprep.subr.mxu0 0.0
    %365 = vmatpush1.msra.mxu0 0.0
    %366 = vmatprep.subr.mxu0 0.0
    %367 = vmatpush1.msra.mxu0 0.0
    %368 = vmatprep.subr.mxu0 0.0
    %369 = vmatpush1.msra.mxu0 0.0
    %370 = vmatprep.subr.mxu0 0.0
    %371 = vmatpush1.msra.mxu0 0.0
    %372 = vmatprep.subr.mxu0 %v170
    %373 = vmatpush1.msra.mxu0 %v169
    %374 = vmatprep.subr.mxu0 %v152
    %375 = vmatpush1.msra.mxu0 %v151
    %376 = vmatprep.subr.mxu0 %v134
    %377 = vmatpush1.msra.mxu0 %v133
    %378 = vmatprep.subr.mxu0 %v116
    %379 = vmatpush1.msra.mxu0 %v115
    %380 = vmatprep.subr.mxu0 %v98
    %381 = vmatpush1.msra.mxu0 %v97
    %382 = vmatprep.subr.mxu0 %v80
    %383 = vmatpush1.msra.mxu0 %v79
    %384 = vmatprep.subr.mxu0 %v62
    %385 = vmatpush1.msra.mxu0 %v61
    %386 = vmatprep.subr.mxu0 %v44
    %387 = vmatpush1.msra.mxu0 %v43
    %388 = vmatprep.subr.mxu0 0.0
    %389 = vmatpush2.msra.mxu0 0.0
    %390 = vmatprep.subr.mxu0 0.0
    %391 = vmatpush2.msra.mxu0 0.0
    %392 = vmatprep.subr.mxu0 0.0
    %393 = vmatpush2.msra.mxu0 0.0
    %394 = vmatprep.subr.mxu0 0.0
    %395 = vmatpush2.msra.mxu0 0.0
    %396 = vmatprep.subr.mxu0 0.0
    %397 = vmatpush2.msra.mxu0 0.0
    %398 = vmatprep.subr.mxu0 0.0
    %399 = vmatpush2.msra.mxu0 0.0
    %400 = vmatprep.subr.mxu0 0.0
    %401 = vmatpush2.msra.mxu0 0.0
    %402 = vmatprep.subr.mxu0 0.0
    %403 = vmatpush2.msra.mxu0 0.0
    %404 = vmatprep.subr.mxu0 0.0
    %405 = vmatpush2.msra.mxu0 0.0
    %406 = vmatprep.subr.mxu0 0.0
    %407 = vmatpush2.msra.mxu0 0.0
    %408 = vmatprep.subr.mxu0 0.0
    %409 = vmatpush2.msra.mxu0 0.0
    %410 = vmatprep.subr.mxu0 0.0
    %411 = vmatpush2.msra.mxu0 0.0
    %412 = vmatprep.subr.mxu0 0.0
    %413 = vmatpush2.msra.mxu0 0.0
    %414 = vmatprep.subr.mxu0 0.0
    %415 = vmatpush2.msra.mxu0 0.0
    %416 = vmatprep.subr.mxu0 0.0
    %417 = vmatpush2.msra.mxu0 0.0
    %418 = vmatprep.subr.mxu0 0.0
    %419 = vmatpush2.msra.mxu0 0.0
    %420 = vmatprep.mubr.f32.mxu0 0.0
    %421 = vmatmul.mubr.f32.gmra.mxu0 %v283
    %v422 = vpop.f32.mrf.mxu0
    %v423 = vadd.f32 %v202, %v422
    %v424 = vpop.f32.mrf.mxu0
    %v425 = vadd.f32 %v206, %v424
    %426 = vdwg.mxu0
    %427 = vmatprep.subr.mxu0 0.0
    %428 = vmatpush1.msra.mxu0 0.0
    %429 = vmatprep.subr.mxu0 0.0
    %430 = vmatpush1.msra.mxu0 0.0
    %431 = vmatprep.subr.mxu0 0.0
    %432 = vmatpush1.msra.mxu0 0.0
    %433 = vmatprep.subr.mxu0 0.0
    %434 = vmatpush1.msra.mxu0 0.0
    %435 = vmatprep.subr.mxu0 0.0
    %436 = vmatpush1.msra.mxu0 0.0
    %437 = vmatprep.subr.mxu0 0.0
    %438 = vmatpush1.msra.mxu0 0.0
    %439 = vmatprep.subr.mxu0 0.0
    %440 = vmatpush1.msra.mxu0 0.0
    %441 = vmatprep.subr.mxu0 0.0
    %442 = vmatpush1.msra.mxu0 0.0
    %443 = vmatprep.subr.mxu0 %v172
    %444 = vmatpush1.msra.mxu0 %v171
    %445 = vmatprep.subr.mxu0 %v154
    %446 = vmatpush1.msra.mxu0 %v153
    %447 = vmatprep.subr.mxu0 %v136
    %448 = vmatpush1.msra.mxu0 %v135
    %449 = vmatprep.subr.mxu0 %v118
    %450 = vmatpush1.msra.mxu0 %v117
    %451 = vmatprep.subr.mxu0 %v100
    %452 = vmatpush1.msra.mxu0 %v99
    %453 = vmatprep.subr.mxu0 %v82
    %454 = vmatpush1.msra.mxu0 %v81
    %455 = vmatprep.subr.mxu0 %v64
    %456 = vmatpush1.msra.mxu0 %v63
    %457 = vmatprep.subr.mxu0 %v46
    %458 = vmatpush1.msra.mxu0 %v45
    %459 = vmatprep.subr.mxu0 0.0
    %460 = vmatpush2.msra.mxu0 0.0
    %461 = vmatprep.subr.mxu0 0.0
    %462 = vmatpush2.msra.mxu0 0.0
    %463 = vmatprep.subr.mxu0 0.0
    %464 = vmatpush2.msra.mxu0 0.0
    %465 = vmatprep.subr.mxu0 0.0
    %466 = vmatpush2.msra.mxu0 0.0
    %467 = vmatprep.subr.mxu0 0.0
    %468 = vmatpush2.msra.mxu0 0.0
    %469 = vmatprep.subr.mxu0 0.0
    %470 = vmatpush2.msra.mxu0 0.0
    %471 = vmatprep.subr.mxu0 0.0
    %472 = vmatpush2.msra.mxu0 0.0
    %473 = vmatprep.subr.mxu0 0.0
    %474 = vmatpush2.msra.mxu0 0.0
    %475 = vmatprep.subr.mxu0 0.0
    %476 = vmatpush2.msra.mxu0 0.0
    %477 = vmatprep.subr.mxu0 0.0
    %478 = vmatpush2.msra.mxu0 0.0
    %479 = vmatprep.subr.mxu0 0.0
    %480 = vmatpush2.msra.mxu0 0.0
    %481 = vmatprep.subr.mxu0 0.0
    %482 = vmatpush2.msra.mxu0 0.0
    %483 = vmatprep.subr.mxu0 0.0
    %484 = vmatpush2.msra.mxu0 0.0
    %485 = vmatprep.subr.mxu0 0.0
    %486 = vmatpush2.msra.mxu0 0.0
    %487 = vmatprep.subr.mxu0 0.0
    %488 = vmatpush2.msra.mxu0 0.0
    %489 = vmatprep.subr.mxu0 0.0
    %490 = vmatpush2.msra.mxu0 0.0
    %491 = vmatprep.mubr.f32.mxu0 0.0
    %492 = vmatmul.mubr.f32.gmra.mxu0 %v283
    %v493 = vpop.f32.mrf.mxu0
    %v494 = vadd.f32 %v210, %v493
    %v495 = vpop.f32.mrf.mxu0
    %v496 = vadd.f32 %v214, %v495
    %497 = vdwg.mxu0
    %498 = vmatprep.subr.mxu0 0.0
    %499 = vmatpush1.msra.mxu0 0.0
    %500 = vmatprep.subr.mxu0 0.0
    %501 = vmatpush1.msra.mxu0 0.0
    %502 = vmatprep.subr.mxu0 0.0
    %503 = vmatpush1.msra.mxu0 0.0
    %504 = vmatprep.subr.mxu0 0.0
    %505 = vmatpush1.msra.mxu0 0.0
    %506 = vmatprep.subr.mxu0 0.0
    %507 = vmatpush1.msra.mxu0 0.0
    %508 = vmatprep.subr.mxu0 0.0
    %509 = vmatpush1.msra.mxu0 0.0
    %510 = vmatprep.subr.mxu0 0.0
    %511 = vmatpush1.msra.mxu0 0.0
    %512 = vmatprep.subr.mxu0 0.0
    %513 = vmatpush1.msra.mxu0 0.0
    %514 = vmatprep.subr.mxu0 %v174
    %515 = vmatpush1.msra.mxu0 %v173
    %516 = vmatprep.subr.mxu0 %v156
    %517 = vmatpush1.msra.mxu0 %v155
    %518 = vmatprep.subr.mxu0 %v138
    %519 = vmatpush1.msra.mxu0 %v137
    %520 = vmatprep.subr.mxu0 %v120
    %521 = vmatpush1.msra.mxu0 %v119
    %522 = vmatprep.subr.mxu0 %v102
    %523 = vmatpush1.msra.mxu0 %v101
    %524 = vmatprep.subr.mxu0 %v84
    %525 = vmatpush1.msra.mxu0 %v83
    %526 = vmatprep.subr.mxu0 %v66
    %527 = vmatpush1.msra.mxu0 %v65
    %528 = vmatprep.subr.mxu0 %v48
    %529 = vmatpush1.msra.mxu0 %v47
    %530 = vmatprep.subr.mxu0 0.0
    %531 = vmatpush2.msra.mxu0 0.0
    %532 = vmatprep.subr.mxu0 0.0
    %533 = vmatpush2.msra.mxu0 0.0
    %534 = vmatprep.subr.mxu0 0.0
    %535 = vmatpush2.msra.mxu0 0.0
    %536 = vmatprep.subr.mxu0 0.0
    %537 = vmatpush2.msra.mxu0 0.0
    %538 = vmatprep.subr.mxu0 0.0
    %539 = vmatpush2.msra.mxu0 0.0
    %540 = vmatprep.subr.mxu0 0.0
    %541 = vmatpush2.msra.mxu0 0.0
    %542 = vmatprep.subr.mxu0 0.0
    %543 = vmatpush2.msra.mxu0 0.0
    %544 = vmatprep.subr.mxu0 0.0
    %545 = vmatpush2.msra.mxu0 0.0
    %546 = vmatprep.subr.mxu0 0.0
    %547 = vmatpush2.msra.mxu0 0.0
    %548 = vmatprep.subr.mxu0 0.0
    %549 = vmatpush2.msra.mxu0 0.0
    %550 = vmatprep.subr.mxu0 0.0
    %551 = vmatpush2.msra.mxu0 0.0
    %552 = vmatprep.subr.mxu0 0.0
    %553 = vmatpush2.msra.mxu0 0.0
    %554 = vmatprep.subr.mxu0 0.0
    %555 = vmatpush2.msra.mxu0 0.0
    %556 = vmatprep.subr.mxu0 0.0
    %557 = vmatpush2.msra.mxu0 0.0
    %558 = vmatprep.subr.mxu0 0.0
    %559 = vmatpush2.msra.mxu0 0.0
    %560 = vmatprep.subr.mxu0 0.0
    %561 = vmatpush2.msra.mxu0 0.0
    %562 = vmatprep.mubr.f32.mxu0 0.0
    %563 = vmatmul.mubr.f32.gmra.mxu0 %v283
    %v564 = vpop.f32.mrf.mxu0
    %v565 = vadd.f32 %v218, %v564
    %v566 = vpop.f32.mrf.mxu0
    %v567 = vadd.f32 %v222, %v566
    %568 = vdwg.mxu0
    %569 = vmatprep.subr.mxu0 0.0
    %570 = vmatpush1.msra.mxu0 0.0
    %571 = vmatprep.subr.mxu0 0.0
    %572 = vmatpush1.msra.mxu0 0.0
    %573 = vmatprep.subr.mxu0 0.0
    %574 = vmatpush1.msra.mxu0 0.0
    %575 = vmatprep.subr.mxu0 0.0
    %576 = vmatpush1.msra.mxu0 0.0
    %577 = vmatprep.subr.mxu0 0.0
    %578 = vmatpush1.msra.mxu0 0.0
    %579 = vmatprep.subr.mxu0 0.0
    %580 = vmatpush1.msra.mxu0 0.0
    %581 = vmatprep.subr.mxu0 0.0
    %582 = vmatpush1.msra.mxu0 0.0
    %583 = vmatprep.subr.mxu0 0.0
    %584 = vmatpush1.msra.mxu0 0.0
    %585 = vmatprep.subr.mxu0 %v176
    %586 = vmatpush1.msra.mxu0 %v175
    %587 = vmatprep.subr.mxu0 %v158
    %588 = vmatpush1.msra.mxu0 %v157
    %589 = vmatprep.subr.mxu0 %v140
    %590 = vmatpush1.msra.mxu0 %v139
    %591 = vmatprep.subr.mxu0 %v122
    %592 = vmatpush1.msra.mxu0 %v121
    %593 = vmatprep.subr.mxu0 %v104
    %594 = vmatpush1.msra.mxu0 %v103
    %595 = vmatprep.subr.mxu0 %v86
    %596 = vmatpush1.msra.mxu0 %v85
    %597 = vmatprep.subr.mxu0 %v68
    %598 = vmatpush1.msra.mxu0 %v67
    %599 = vmatprep.subr.mxu0 %v50
    %600 = vmatpush1.msra.mxu0 %v49
    %601 = vmatprep.subr.mxu0 0.0
    %602 = vmatpush2.msra.mxu0 0.0
    %603 = vmatprep.subr.mxu0 0.0
    %604 = vmatpush2.msra.mxu0 0.0
    %605 = vmatprep.subr.mxu0 0.0
    %606 = vmatpush2.msra.mxu0 0.0
    %607 = vmatprep.subr.mxu0 0.0
    %608 = vmatpush2.msra.mxu0 0.0
    %609 = vmatprep.subr.mxu0 0.0
    %610 = vmatpush2.msra.mxu0 0.0
    %611 = vmatprep.subr.mxu0 0.0
    %612 = vmatpush2.msra.mxu0 0.0
    %613 = vmatprep.subr.mxu0 0.0
    %614 = vmatpush2.msra.mxu0 0.0
    %615 = vmatprep.subr.mxu0 0.0
    %616 = vmatpush2.msra.mxu0 0.0
    %617 = vmatprep.subr.mxu0 0.0
    %618 = vmatpush2.msra.mxu0 0.0
    %619 = vmatprep.subr.mxu0 0.0
    %620 = vmatpush2.msra.mxu0 0.0
    %621 = vmatprep.subr.mxu0 0.0
    %622 = vmatpush2.msra.mxu0 0.0
    %623 = vmatprep.subr.mxu0 0.0
    %624 = vmatpush2.msra.mxu0 0.0
    %625 = vmatprep.subr.mxu0 0.0
    %626 = vmatpush2.msra.mxu0 0.0
    %627 = vmatprep.subr.mxu0 0.0
    %628 = vmatpush2.msra.mxu0 0.0
    %629 = vmatprep.subr.mxu0 0.0
    %630 = vmatpush2.msra.mxu0 0.0
    %631 = vmatprep.subr.mxu0 0.0
    %632 = vmatpush2.msra.mxu0 0.0
    %633 = vmatprep.mubr.f32.mxu0 0.0
    %634 = vmatmul.mubr.f32.gmra.mxu0 %v283
    %v635 = vpop.f32.mrf.mxu0
    %v636 = vadd.f32 %v226, %v635
    %v637 = vpop.f32.mrf.mxu0
    %v638 = vadd.f32 %v230, %v637
    %639 = vdwg.mxu0
    %640 = vmatprep.subr.mxu0 0.0
    %641 = vmatpush1.msra.mxu0 0.0
    %642 = vmatprep.subr.mxu0 0.0
    %643 = vmatpush1.msra.mxu0 0.0
    %644 = vmatprep.subr.mxu0 0.0
    %645 = vmatpush1.msra.mxu0 0.0
    %646 = vmatprep.subr.mxu0 0.0
    %647 = vmatpush1.msra.mxu0 0.0
    %648 = vmatprep.subr.mxu0 0.0
    %649 = vmatpush1.msra.mxu0 0.0
    %650 = vmatprep.subr.mxu0 0.0
    %651 = vmatpush1.msra.mxu0 0.0
    %652 = vmatprep.subr.mxu0 0.0
    %653 = vmatpush1.msra.mxu0 0.0
    %654 = vmatprep.subr.mxu0 0.0
    %655 = vmatpush1.msra.mxu0 0.0
    %656 = vmatprep.subr.mxu0 %v178
    %657 = vmatpush1.msra.mxu0 %v177
    %658 = vmatprep.subr.mxu0 %v160
    %659 = vmatpush1.msra.mxu0 %v159
    %660 = vmatprep.subr.mxu0 %v142
    %661 = vmatpush1.msra.mxu0 %v141
    %662 = vmatprep.subr.mxu0 %v124
    %663 = vmatpush1.msra.mxu0 %v123
    %664 = vmatprep.subr.mxu0 %v106
    %665 = vmatpush1.msra.mxu0 %v105
    %666 = vmatprep.subr.mxu0 %v88
    %667 = vmatpush1.msra.mxu0 %v87
    %668 = vmatprep.subr.mxu0 %v70
    %669 = vmatpush1.msra.mxu0 %v69
    %670 = vmatprep.subr.mxu0 %v52
    %671 = vmatpush1.msra.mxu0 %v51
    %672 = vmatprep.subr.mxu0 0.0
    %673 = vmatpush2.msra.mxu0 0.0
    %674 = vmatprep.subr.mxu0 0.0
    %675 = vmatpush2.msra.mxu0 0.0
    %676 = vmatprep.subr.mxu0 0.0
    %677 = vmatpush2.msra.mxu0 0.0
    %678 = vmatprep.subr.mxu0 0.0
    %679 = vmatpush2.msra.mxu0 0.0
    %680 = vmatprep.subr.mxu0 0.0
    %681 = vmatpush2.msra.mxu0 0.0
    %682 = vmatprep.subr.mxu0 0.0
    %683 = vmatpush2.msra.mxu0 0.0
    %684 = vmatprep.subr.mxu0 0.0
    %685 = vmatpush2.msra.mxu0 0.0
    %686 = vmatprep.subr.mxu0 0.0
    %687 = vmatpush2.msra.mxu0 0.0
    %688 = vmatprep.subr.mxu0 0.0
    %689 = vmatpush2.msra.mxu0 0.0
    %690 = vmatprep.subr.mxu0 0.0
    %691 = vmatpush2.msra.mxu0 0.0
    %692 = vmatprep.subr.mxu0 0.0
    %693 = vmatpush2.msra.mxu0 0.0
    %694 = vmatprep.subr.mxu0 0.0
    %695 = vmatpush2.msra.mxu0 0.0
    %696 = vmatprep.subr.mxu0 0.0
    %697 = vmatpush2.msra.mxu0 0.0
    %698 = vmatprep.subr.mxu0 0.0
    %699 = vmatpush2.msra.mxu0 0.0
    %700 = vmatprep.subr.mxu0 0.0
    %701 = vmatpush2.msra.mxu0 0.0
    %702 = vmatprep.subr.mxu0 0.0
    %703 = vmatpush2.msra.mxu0 0.0
    %704 = vmatprep.mubr.f32.mxu0 0.0
    %705 = vmatmul.mubr.f32.gmra.mxu0 %v283
    %v706 = vpop.f32.mrf.mxu0
    %v707 = vadd.f32 %v234, %v706
    %v708 = vpop.f32.mrf.mxu0
    %v709 = vadd.f32 %v238, %v708
    %710 = vdwg.mxu0
    %711 = vmatprep.subr.mxu0 0.0
    %712 = vmatpush1.msra.mxu0 0.0
    %713 = vmatprep.subr.mxu0 0.0
    %714 = vmatpush1.msra.mxu0 0.0
    %715 = vmatprep.subr.mxu0 0.0
    %716 = vmatpush1.msra.mxu0 0.0
    %717 = vmatprep.subr.mxu0 0.0
    %718 = vmatpush1.msra.mxu0 0.0
    %719 = vmatprep.subr.mxu0 0.0
    %720 = vmatpush1.msra.mxu0 0.0
    %721 = vmatprep.subr.mxu0 0.0
    %722 = vmatpush1.msra.mxu0 0.0
    %723 = vmatprep.subr.mxu0 0.0
    %724 = vmatpush1.msra.mxu0 0.0
    %725 = vmatprep.subr.mxu0 0.0
    %726 = vmatpush1.msra.mxu0 0.0
    %727 = vmatprep.subr.mxu0 %v180
    %728 = vmatpush1.msra.mxu0 %v179
    %729 = vmatprep.subr.mxu0 %v162
    %730 = vmatpush1.msra.mxu0 %v161
    %731 = vmatprep.subr.mxu0 %v144
    %732 = vmatpush1.msra.mxu0 %v143
    %733 = vmatprep.subr.mxu0 %v126
    %734 = vmatpush1.msra.mxu0 %v125
    %735 = vmatprep.subr.mxu0 %v108
    %736 = vmatpush1.msra.mxu0 %v107
    %737 = vmatprep.subr.mxu0 %v90
    %738 = vmatpush1.msra.mxu0 %v89
    %739 = vmatprep.subr.mxu0 %v72
    %740 = vmatpush1.msra.mxu0 %v71
    %741 = vmatprep.subr.mxu0 %v54
    %742 = vmatpush1.msra.mxu0 %v53
    %743 = vmatprep.subr.mxu0 0.0
    %744 = vmatpush2.msra.mxu0 0.0
    %745 = vmatprep.subr.mxu0 0.0
    %746 = vmatpush2.msra.mxu0 0.0
    %747 = vmatprep.subr.mxu0 0.0
    %748 = vmatpush2.msra.mxu0 0.0
    %749 = vmatprep.subr.mxu0 0.0
    %750 = vmatpush2.msra.mxu0 0.0
    %751 = vmatprep.subr.mxu0 0.0
    %752 = vmatpush2.msra.mxu0 0.0
    %753 = vmatprep.subr.mxu0 0.0
    %754 = vmatpush2.msra.mxu0 0.0
    %755 = vmatprep.subr.mxu0 0.0
    %756 = vmatpush2.msra.mxu0 0.0
    %757 = vmatprep.subr.mxu0 0.0
    %758 = vmatpush2.msra.mxu0 0.0
    %759 = vmatprep.subr.mxu0 0.0
    %760 = vmatpush2.msra.mxu0 0.0
    %761 = vmatprep.subr.mxu0 0.0
    %762 = vmatpush2.msra.mxu0 0.0
    %763 = vmatprep.subr.mxu0 0.0
    %764 = vmatpush2.msra.mxu0 0.0
    %765 = vmatprep.subr.mxu0 0.0
    %766 = vmatpush2.msra.mxu0 0.0
    %767 = vmatprep.subr.mxu0 0.0
    %768 = vmatpush2.msra.mxu0 0.0
    %769 = vmatprep.subr.mxu0 0.0
    %770 = vmatpush2.msra.mxu0 0.0
    %771 = vmatprep.subr.mxu0 0.0
    %772 = vmatpush2.msra.mxu0 0.0
    %773 = vmatprep.subr.mxu0 0.0
    %774 = vmatpush2.msra.mxu0 0.0
    %775 = vmatprep.mubr.f32.mxu0 0.0
    %776 = vmatmul.mubr.f32.gmra.mxu0 %v283
    %v777 = vpop.f32.mrf.mxu0
    %v778 = vadd.f32 %v242, %v777
    %v779 = vpop.f32.mrf.mxu0
    %v780 = vadd.f32 %v246, %v779
    %781 = vdwg.mxu0
    %782 = vmatprep.subr.mxu0 0.0
    %783 = vmatpush1.msra.mxu0 0.0
    %784 = vmatprep.subr.mxu0 0.0
    %785 = vmatpush1.msra.mxu0 0.0
    %786 = vmatprep.subr.mxu0 0.0
    %787 = vmatpush1.msra.mxu0 0.0
    %788 = vmatprep.subr.mxu0 0.0
    %789 = vmatpush1.msra.mxu0 0.0
    %790 = vmatprep.subr.mxu0 0.0
    %791 = vmatpush1.msra.mxu0 0.0
    %792 = vmatprep.subr.mxu0 0.0
    %793 = vmatpush1.msra.mxu0 0.0
    %794 = vmatprep.subr.mxu0 0.0
    %795 = vmatpush1.msra.mxu0 0.0
    %796 = vmatprep.subr.mxu0 0.0
    %797 = vmatpush1.msra.mxu0 0.0
    %798 = vmatprep.subr.mxu0 %v182
    %799 = vmatpush1.msra.mxu0 %v181
    %800 = vmatprep.subr.mxu0 %v164
    %801 = vmatpush1.msra.mxu0 %v163
    %802 = vmatprep.subr.mxu0 %v146
    %803 = vmatpush1.msra.mxu0 %v145
    %804 = vmatprep.subr.mxu0 %v128
    %805 = vmatpush1.msra.mxu0 %v127
    %806 = vmatprep.subr.mxu0 %v110
    %807 = vmatpush1.msra.mxu0 %v109
    %808 = vmatprep.subr.mxu0 %v92
    %809 = vmatpush1.msra.mxu0 %v91
    %810 = vmatprep.subr.mxu0 %v74
    %811 = vmatpush1.msra.mxu0 %v73
    %812 = vmatprep.subr.mxu0 %v56
    %813 = vmatpush1.msra.mxu0 %v55
    %814 = vmatprep.subr.mxu0 0.0
    %815 = vmatpush2.msra.mxu0 0.0
    %816 = vmatprep.subr.mxu0 0.0
    %817 = vmatpush2.msra.mxu0 0.0
    %818 = vmatprep.subr.mxu0 0.0
    %819 = vmatpush2.msra.mxu0 0.0
    %820 = vmatprep.subr.mxu0 0.0
    %821 = vmatpush2.msra.mxu0 0.0
    %822 = vmatprep.subr.mxu0 0.0
    %823 = vmatpush2.msra.mxu0 0.0
    %824 = vmatprep.subr.mxu0 0.0
    %825 = vmatpush2.msra.mxu0 0.0
    %826 = vmatprep.subr.mxu0 0.0
    %827 = vmatpush2.msra.mxu0 0.0
    %828 = vmatprep.subr.mxu0 0.0
    %829 = vmatpush2.msra.mxu0 0.0
    %830 = vmatprep.subr.mxu0 0.0
    %831 = vmatpush2.msra.mxu0 0.0
    %832 = vmatprep.subr.mxu0 0.0
    %833 = vmatpush2.msra.mxu0 0.0
    %834 = vmatprep.subr.mxu0 0.0
    %835 = vmatpush2.msra.mxu0 0.0
    %836 = vmatprep.subr.mxu0 0.0
    %837 = vmatpush2.msra.mxu0 0.0
    %838 = vmatprep.subr.mxu0 0.0
    %839 = vmatpush2.msra.mxu0 0.0
    %840 = vmatprep.subr.mxu0 0.0
    %841 = vmatpush2.msra.mxu0 0.0
    %842 = vmatprep.subr.mxu0 0.0
    %843 = vmatpush2.msra.mxu0 0.0
    %844 = vmatprep.subr.mxu0 0.0
    %845 = vmatpush2.msra.mxu0 0.0
    %846 = vmatprep.mubr.f32.mxu0 0.0
    %847 = vmatmul.mubr.f32.gmra.mxu0 %v283
    %v848 = vpop.f32.mrf.mxu0
    %v849 = vadd.f32 %v250, %v848
    %v850 = vpop.f32.mrf.mxu0
    %v851 = vadd.f32 %v254, %v850
    %852 = vdwg.mxu0
    %853 = vmatprep.subr.mxu0 0.0
    %854 = vmatpush1.msra.mxu0 0.0
    %855 = vmatprep.subr.mxu0 0.0
    %856 = vmatpush1.msra.mxu0 0.0
    %857 = vmatprep.subr.mxu0 0.0
    %858 = vmatpush1.msra.mxu0 0.0
    %859 = vmatprep.subr.mxu0 0.0
    %860 = vmatpush1.msra.mxu0 0.0
    %861 = vmatprep.subr.mxu0 0.0
    %862 = vmatpush1.msra.mxu0 0.0
    %863 = vmatprep.subr.mxu0 0.0
    %864 = vmatpush1.msra.mxu0 0.0
    %865 = vmatprep.subr.mxu0 0.0
    %866 = vmatpush1.msra.mxu0 0.0
    %867 = vmatprep.subr.mxu0 0.0
    %868 = vmatpush1.msra.mxu0 0.0
    %869 = vmatprep.subr.mxu0 %v184
    %870 = vmatpush1.msra.mxu0 %v183
    %871 = vmatprep.subr.mxu0 %v166
    %872 = vmatpush1.msra.mxu0 %v165
    %873 = vmatprep.subr.mxu0 %v148
    %874 = vmatpush1.msra.mxu0 %v147
    %875 = vmatprep.subr.mxu0 %v130
    %876 = vmatpush1.msra.mxu0 %v129
    %877 = vmatprep.subr.mxu0 %v112
    %878 = vmatpush1.msra.mxu0 %v111
    %879 = vmatprep.subr.mxu0 %v94
    %880 = vmatpush1.msra.mxu0 %v93
    %881 = vmatprep.subr.mxu0 %v76
    %882 = vmatpush1.msra.mxu0 %v75
    %883 = vmatprep.subr.mxu0 %v58
    %884 = vmatpush1.msra.mxu0 %v57
    %885 = vmatprep.subr.mxu0 0.0
    %886 = vmatpush2.msra.mxu0 0.0
    %887 = vmatprep.subr.mxu0 0.0
    %888 = vmatpush2.msra.mxu0 0.0
    %889 = vmatprep.subr.mxu0 0.0
    %890 = vmatpush2.msra.mxu0 0.0
    %891 = vmatprep.subr.mxu0 0.0
    %892 = vmatpush2.msra.mxu0 0.0
    %893 = vmatprep.subr.mxu0 0.0
    %894 = vmatpush2.msra.mxu0 0.0
    %895 = vmatprep.subr.mxu0 0.0
    %896 = vmatpush2.msra.mxu0 0.0
    %897 = vmatprep.subr.mxu0 0.0
    %898 = vmatpush2.msra.mxu0 0.0
    %899 = vmatprep.subr.mxu0 0.0
    %900 = vmatpush2.msra.mxu0 0.0
    %901 = vmatprep.subr.mxu0 0.0
    %902 = vmatpush2.msra.mxu0 0.0
    %903 = vmatprep.subr.mxu0 0.0
    %904 = vmatpush2.msra.mxu0 0.0
    %905 = vmatprep.subr.mxu0 0.0
    %906 = vmatpush2.msra.mxu0 0.0
    %907 = vmatprep.subr.mxu0 0.0
    %908 = vmatpush2.msra.mxu0 0.0
    %909 = vmatprep.subr.mxu0 0.0
    %910 = vmatpush2.msra.mxu0 0.0
    %911 = vmatprep.subr.mxu0 0.0
    %912 = vmatpush2.msra.mxu0 0.0
    %913 = vmatprep.subr.mxu0 0.0
    %914 = vmatpush2.msra.mxu0 0.0
    %915 = vmatprep.subr.mxu0 0.0
    %916 = vmatpush2.msra.mxu0 0.0
    %917 = vmatprep.mubr.f32.mxu0 0.0
    %918 = vmatmul.mubr.f32.gmra.mxu0 %v283
    %v919 = vpop.f32.mrf.mxu0
    %v920 = vadd.f32 %v258, %v919
    %v921 = vpop.f32.mrf.mxu0
    %v922 = vadd.f32 %v262, %v921
    %923 = vdwg.mxu0
    %v942 = vcombine.low %v352, %v354
    %v943 = vcombine.high %v352, %v354
    %v944 = vcombine.low %v423, %v425
    %v945 = vcombine.high %v423, %v425
    %v946 = vcombine.low %v494, %v496
    %v947 = vcombine.high %v494, %v496
    %v948 = vcombine.low %v565, %v567
    %v949 = vcombine.high %v565, %v567
    %v951 = vunpack.c.l.s4 1966171168
    %v952 = vunpack.c.0.s8 %v951
    %v953 = vlaneseq
    %v954 = vshrl.u32 %v953, 7
    %v955 = vsub.s32 %v952, %v954
    %v956 = vrot.slane %v942, %v955
    %v958 = vunpack.c.l.s4 1966171168
    %v959 = vunpack.c.0.s8 %v958
    %v960 = vlaneseq
    %v961 = vshrl.u32 %v960, 7
    %v962 = vsub.s32 %v959, %v961
    %v963 = vrot.slane %v943, %v962
    %v965 = vunpack.c.l.s4 1966171168
    %v966 = vunpack.c.0.s8 %v965
    %v967 = vlaneseq
    %v968 = vshrl.u32 %v967, 7
    %v969 = vsub.s32 %v966, %v968
    %v970 = vrot.slane %v944, %v969
    %v972 = vunpack.c.l.s4 1966171168
    %v973 = vunpack.c.0.s8 %v972
    %v974 = vlaneseq
    %v975 = vshrl.u32 %v974, 7
    %v976 = vsub.s32 %v973, %v975
    %v977 = vrot.slane %v945, %v976
    %v979 = vunpack.c.l.s4 1966171168
    %v980 = vunpack.c.0.s8 %v979
    %v981 = vlaneseq
    %v982 = vshrl.u32 %v981, 7
    %v983 = vsub.s32 %v980, %v982
    %v984 = vrot.slane %v946, %v983
    %v986 = vunpack.c.l.s4 1966171168
    %v987 = vunpack.c.0.s8 %v986
    %v988 = vlaneseq
    %v989 = vshrl.u32 %v988, 7
    %v990 = vsub.s32 %v987, %v989
    %v991 = vrot.slane %v947, %v990
    %v993 = vunpack.c.l.s4 1966171168
    %v994 = vunpack.c.0.s8 %v993
    %v995 = vlaneseq
    %v996 = vshrl.u32 %v995, 7
    %v997 = vsub.s32 %v994, %v996
    %v998 = vrot.slane %v948, %v997
    %v1000 = vunpack.c.l.s4 1966171168
    %v1001 = vunpack.c.0.s8 %v1000
    %v1002 = vlaneseq
    %v1003 = vshrl.u32 %v1002, 7
    %v1004 = vsub.s32 %v1001, %v1003
    %v1005 = vrot.slane %v949, %v1004
    %v1006 = vcombine.low %v956, %v970
    %v1007 = vcombine.high %v956, %v970
    %v1008 = vcombine.low %v963, %v977
    %v1009 = vcombine.high %v963, %v977
    %v1010 = vcombine.low %v984, %v998
    %v1011 = vcombine.high %v984, %v998
    %v1012 = vcombine.low %v991, %v1005
    %v1013 = vcombine.high %v991, %v1005
    %v1015 = vunpack.c.l.s4 1966171168
    %v1016 = vunpack.c.0.s8 %v1015
    %v1017 = vlaneseq
    %v1018 = vshrl.u32 %v1017, 7
    %v1019 = vsub.s32 %v1016, %v1018
    %v1020 = vrot.slane %v1006, %v1019
    %v1022 = vunpack.c.l.s4 1966171168
    %v1023 = vunpack.c.0.s8 %v1022
    %v1024 = vlaneseq
    %v1025 = vshrl.u32 %v1024, 7
    %v1026 = vsub.s32 %v1023, %v1025
    %v1027 = vrot.slane %v1008, %v1026
    %v1029 = vunpack.c.l.s4 1966171168
    %v1030 = vunpack.c.0.s8 %v1029
    %v1031 = vlaneseq
    %v1032 = vshrl.u32 %v1031, 7
    %v1033 = vsub.s32 %v1030, %v1032
    %v1034 = vrot.slane %v1007, %v1033
    %v1036 = vunpack.c.l.s4 1966171168
    %v1037 = vunpack.c.0.s8 %v1036
    %v1038 = vlaneseq
    %v1039 = vshrl.u32 %v1038, 7
    %v1040 = vsub.s32 %v1037, %v1039
    %v1041 = vrot.slane %v1009, %v1040
    %v1043 = vunpack.c.l.s4 1966171168
    %v1044 = vunpack.c.0.s8 %v1043
    %v1045 = vlaneseq
    %v1046 = vshrl.u32 %v1045, 7
    %v1047 = vsub.s32 %v1044, %v1046
    %v1048 = vrot.slane %v1010, %v1047
    %v1050 = vunpack.c.l.s4 1966171168
    %v1051 = vunpack.c.0.s8 %v1050
    %v1052 = vlaneseq
    %v1053 = vshrl.u32 %v1052, 7
    %v1054 = vsub.s32 %v1051, %v1053
    %v1055 = vrot.slane %v1012, %v1054
    %v1057 = vunpack.c.l.s4 1966171168
    %v1058 = vunpack.c.0.s8 %v1057
    %v1059 = vlaneseq
    %v1060 = vshrl.u32 %v1059, 7
    %v1061 = vsub.s32 %v1058, %v1060
    %v1062 = vrot.slane %v1011, %v1061
    %v1064 = vunpack.c.l.s4 1966171168
    %v1065 = vunpack.c.0.s8 %v1064
    %v1066 = vlaneseq
    %v1067 = vshrl.u32 %v1066, 7
    %v1068 = vsub.s32 %v1065, %v1067
    %v1069 = vrot.slane %v1013, %v1068
    %v1070 = vcombine.low %v1020, %v1048
    %v1071 = vcombine.high %v1020, %v1048
    %v1072 = vcombine.low %v1027, %v1055
    %v1073 = vcombine.high %v1027, %v1055
    %v1074 = vcombine.low %v1034, %v1062
    %v1075 = vcombine.high %v1034, %v1062
    %v1076 = vcombine.low %v1041, %v1069
    %v1077 = vcombine.high %v1041, %v1069
    %v1078 = vcombine.low %v636, %v638
    %v1079 = vcombine.high %v636, %v638
    %v1080 = vcombine.low %v707, %v709
    %v1081 = vcombine.high %v707, %v709
    %v1082 = vcombine.low %v778, %v780
    %v1083 = vcombine.high %v778, %v780
    %v1084 = vcombine.low %v849, %v851
    %v1085 = vcombine.high %v849, %v851
    %v1087 = vunpack.c.l.s4 1966171168
    %v1088 = vunpack.c.0.s8 %v1087
    %v1089 = vlaneseq
    %v1090 = vshrl.u32 %v1089, 7
    %v1091 = vsub.s32 %v1088, %v1090
    %v1092 = vrot.slane %v1078, %v1091
    %v1094 = vunpack.c.l.s4 1966171168
    %v1095 = vunpack.c.0.s8 %v1094
    %v1096 = vlaneseq
    %v1097 = vshrl.u32 %v1096, 7
    %v1098 = vsub.s32 %v1095, %v1097
    %v1099 = vrot.slane %v1079, %v1098
    %v1101 = vunpack.c.l.s4 1966171168
    %v1102 = vunpack.c.0.s8 %v1101
    %v1103 = vlaneseq
    %v1104 = vshrl.u32 %v1103, 7
    %v1105 = vsub.s32 %v1102, %v1104
    %v1106 = vrot.slane %v1080, %v1105
    %v1108 = vunpack.c.l.s4 1966171168
    %v1109 = vunpack.c.0.s8 %v1108
    %v1110 = vlaneseq
    %v1111 = vshrl.u32 %v1110, 7
    %v1112 = vsub.s32 %v1109, %v1111
    %v1113 = vrot.slane %v1081, %v1112
    %v1115 = vunpack.c.l.s4 1966171168
    %v1116 = vunpack.c.0.s8 %v1115
    %v1117 = vlaneseq
    %v1118 = vshrl.u32 %v1117, 7
    %v1119 = vsub.s32 %v1116, %v1118
    %v1120 = vrot.slane %v1082, %v1119
    %v1122 = vunpack.c.l.s4 1966171168
    %v1123 = vunpack.c.0.s8 %v1122
    %v1124 = vlaneseq
    %v1125 = vshrl.u32 %v1124, 7
    %v1126 = vsub.s32 %v1123, %v1125
    %v1127 = vrot.slane %v1083, %v1126
    %v1129 = vunpack.c.l.s4 1966171168
    %v1130 = vunpack.c.0.s8 %v1129
    %v1131 = vlaneseq
    %v1132 = vshrl.u32 %v1131, 7
    %v1133 = vsub.s32 %v1130, %v1132
    %v1134 = vrot.slane %v1084, %v1133
    %v1136 = vunpack.c.l.s4 1966171168
    %v1137 = vunpack.c.0.s8 %v1136
    %v1138 = vlaneseq
    %v1139 = vshrl.u32 %v1138, 7
    %v1140 = vsub.s32 %v1137, %v1139
    %v1141 = vrot.slane %v1085, %v1140
    %v1142 = vcombine.low %v1092, %v1106
    %v1143 = vcombine.high %v1092, %v1106
    %v1144 = vcombine.low %v1099, %v1113
    %v1145 = vcombine.high %v1099, %v1113
    %v1146 = vcombine.low %v1120, %v1134
    %v1147 = vcombine.high %v1120, %v1134
    %v1148 = vcombine.low %v1127, %v1141
    %v1149 = vcombine.high %v1127, %v1141
    %v1151 = vunpack.c.l.s4 1966171168
    %v1152 = vunpack.c.0.s8 %v1151
    %v1153 = vlaneseq
    %v1154 = vshrl.u32 %v1153, 7
    %v1155 = vsub.s32 %v1152, %v1154
    %v1156 = vrot.slane %v1142, %v1155
    %v1158 = vunpack.c.l.s4 1966171168
    %v1159 = vunpack.c.0.s8 %v1158
    %v1160 = vlaneseq
    %v1161 = vshrl.u32 %v1160, 7
    %v1162 = vsub.s32 %v1159, %v1161
    %v1163 = vrot.slane %v1144, %v1162
    %v1165 = vunpack.c.l.s4 1966171168
    %v1166 = vunpack.c.0.s8 %v1165
    %v1167 = vlaneseq
    %v1168 = vshrl.u32 %v1167, 7
    %v1169 = vsub.s32 %v1166, %v1168
    %v1170 = vrot.slane %v1143, %v1169
    %v1172 = vunpack.c.l.s4 1966171168
    %v1173 = vunpack.c.0.s8 %v1172
    %v1174 = vlaneseq
    %v1175 = vshrl.u32 %v1174, 7
    %v1176 = vsub.s32 %v1173, %v1175
    %v1177 = vrot.slane %v1145, %v1176
    %v1179 = vunpack.c.l.s4 1966171168
    %v1180 = vunpack.c.0.s8 %v1179
    %v1181 = vlaneseq
    %v1182 = vshrl.u32 %v1181, 7
    %v1183 = vsub.s32 %v1180, %v1182
    %v1184 = vrot.slane %v1146, %v1183
    %v1186 = vunpack.c.l.s4 1966171168
    %v1187 = vunpack.c.0.s8 %v1186
    %v1188 = vlaneseq
    %v1189 = vshrl.u32 %v1188, 7
    %v1190 = vsub.s32 %v1187, %v1189
    %v1191 = vrot.slane %v1148, %v1190
    %v1193 = vunpack.c.l.s4 1966171168
    %v1194 = vunpack.c.0.s8 %v1193
    %v1195 = vlaneseq
    %v1196 = vshrl.u32 %v1195, 7
    %v1197 = vsub.s32 %v1194, %v1196
    %v1198 = vrot.slane %v1147, %v1197
    %v1200 = vunpack.c.l.s4 1966171168
    %v1201 = vunpack.c.0.s8 %v1200
    %v1202 = vlaneseq
    %v1203 = vshrl.u32 %v1202, 7
    %v1204 = vsub.s32 %v1201, %v1203
    %v1205 = vrot.slane %v1149, %v1204
    %v1206 = vcombine.low %v1156, %v1184
    %v1207 = vcombine.high %v1156, %v1184
    %v1208 = vcombine.low %v1163, %v1191
    %v1209 = vcombine.high %v1163, %v1191
    %v1210 = vcombine.low %v1170, %v1198
    %v1211 = vcombine.high %v1170, %v1198
    %v1212 = vcombine.low %v1177, %v1205
    %v1213 = vcombine.high %v1177, %v1205
    %v1214 = vcombine.low %v920, %v922
    %v1215 = vcombine.high %v920, %v922
    %v1217 = vunpack.c.l.s4 1966171168
    %v1218 = vunpack.c.0.s8 %v1217
    %v1219 = vlaneseq
    %v1220 = vshrl.u32 %v1219, 7
    %v1221 = vsub.s32 %v1218, %v1220
    %v1222 = vrot.slane %v1214, %v1221
    %v1224 = vunpack.c.l.s4 1966171168
    %v1225 = vunpack.c.0.s8 %v1224
    %v1226 = vlaneseq
    %v1227 = vshrl.u32 %v1226, 7
    %v1228 = vsub.s32 %v1225, %v1227
    %v1229 = vrot.slane %v1215, %v1228
    %v1230 = vcombine.high %v1222, %v1222
    %v1231 = vcombine.high %v1229, %v1229
    %v1233 = vunpack.c.l.s4 1966171168
    %v1234 = vunpack.c.0.s8 %v1233
    %v1235 = vlaneseq
    %v1236 = vshrl.u32 %v1235, 7
    %v1237 = vsub.s32 %v1234, %v1236
    %v1238 = vrot.slane %v1222, %v1237
    %v1240 = vunpack.c.l.s4 1966171168
    %v1241 = vunpack.c.0.s8 %v1240
    %v1242 = vlaneseq
    %v1243 = vshrl.u32 %v1242, 7
    %v1244 = vsub.s32 %v1241, %v1243
    %v1245 = vrot.slane %v1229, %v1244
    %v1247 = vunpack.c.l.s4 1966171168
    %v1248 = vunpack.c.0.s8 %v1247
    %v1249 = vlaneseq
    %v1250 = vshrl.u32 %v1249, 7
    %v1251 = vsub.s32 %v1248, %v1250
    %v1252 = vrot.slane %v1230, %v1251
    %v1254 = vunpack.c.l.s4 1966171168
    %v1255 = vunpack.c.0.s8 %v1254
    %v1256 = vlaneseq
    %v1257 = vshrl.u32 %v1256, 7
    %v1258 = vsub.s32 %v1255, %v1257
    %v1259 = vrot.slane %v1231, %v1258
    %v1260 = vcombine.high %v1238, %v1238
    %v1261 = vcombine.high %v1245, %v1245
    %v1262 = vcombine.high %v1252, %v1252
    %v1263 = vcombine.high %v1259, %v1259
    %1288 = vst [vmem:[#allocation6] sm:$0xff] %v1070
    %1289 = vst [vmem:[#allocation6 + $0x8] sm:$0xff] %v1206
    %v1290 = vlaneseq
    %vm1291 = vcmp.ge.s32.totalorder %v1290, 0
    %vm1292 = vcmp.lt.s32.totalorder %v1290, 256
    %vm1293 = vmand %vm1291, %vm1292
    %1294 = vst.msk [vmem:[#allocation6 + $0x10] sm:$0x3] %vm1293, %v1238
    %1295 = vst [vmem:[#allocation6 + $0x12] sm:$0xff] %v1074
    %1296 = vst [vmem:[#allocation6 + $0x1a] sm:$0xff] %v1210
    %1297 = vst.msk [vmem:[#allocation6 + $0x22] sm:$0x3] %vm1293, %v1252
    %1298 = vst [vmem:[#allocation6 + $0x24] sm:$0xff] %v1071
    %1299 = vst [vmem:[#allocation6 + $0x2c] sm:$0xff] %v1207
    %1300 = vst.msk [vmem:[#allocation6 + $0x34] sm:$0x3] %vm1293, %v1260
    %1301 = vst [vmem:[#allocation6 + $0x36] sm:$0xff] %v1075
    %1302 = vst [vmem:[#allocation6 + $0x3e] sm:$0xff] %v1211
    %1303 = vst.msk [vmem:[#allocation6 + $0x46] sm:$0x3] %vm1293, %v1262
    %1304 = vst [vmem:[#allocation6 + $0x48] sm:$0xff] %v1072
    %1305 = vst [vmem:[#allocation6 + $0x50] sm:$0xff] %v1208
    %1306 = vst.msk [vmem:[#allocation6 + $0x58] sm:$0x3] %vm1293, %v1245
    %1307 = vst [vmem:[#allocation6 + $0x5a] sm:$0xff] %v1076
    %1308 = vst [vmem:[#allocation6 + $0x62] sm:$0xff] %v1212
    %1309 = vst.msk [vmem:[#allocation6 + $0x6a] sm:$0x3] %vm1293, %v1259
    %1310 = vst [vmem:[#allocation6 + $0x6c] sm:$0xff] %v1073
    %1311 = vst [vmem:[#allocation6 + $0x74] sm:$0xff] %v1209
    %1312 = vst.msk [vmem:[#allocation6 + $0x7c] sm:$0x3] %vm1293, %v1261
    %1313 = vst [vmem:[#allocation6 + $0x7e] sm:$0xff] %v1077
    %1314 = vst [vmem:[#allocation6 + $0x86] sm:$0xff] %v1213
    %1315 = vst.msk [vmem:[#allocation6 + $0x8e] sm:$0x3] %vm1293, %v1263
    // Predicated region
    $region22: #{hypernetwork_forward.1} parent=1 // pred_check
      _
    $region23: #{hypernetwork_forward.1} parent=1 // pred_check_branch
      %1317 = sbr.rel (0) target = $region25
    $region24: #{hypernetwork_forward.1} parent=1 // pred_region
      // Predicated region
      $region26: #{hypernetwork_forward.1} parent=24 // pred_check
        _
      $region27: #{hypernetwork_forward.1} parent=24 // pred_check_branch
        %1319 = sbr.rel (0) target = $region29
      $region28: #{hypernetwork_forward.1} parent=24 // pred_region
        // Predicated region
        $region30: #{hypernetwork_forward.1} parent=28 // pred_check
          _
        $region31: #{hypernetwork_forward.1} parent=28 // pred_check_branch
          %1321 = sbr.rel (0) target = $region33
        $region32: #{hypernetwork_forward.1} parent=28 // pred_region
          %s1322 = scalar_lea.vmem [#allocation6], 16
          %s1323 = scalar_lea.vmem %s3, 16
          loop: start=0, step=1, limit=1
          $region34: #{hypernetwork_forward.1} parent=32 // loop_pre_header
            _
          $region35: #{hypernetwork_forward.1} parent=32 // loop_header
            %s1325 = sphi 0, %s1329
            %p1326 = scmp.ge.s32.totalorder %s1325, 1
            %s1330 = sphi [#allocation6], [#allocation6]
            %s1331 = sphi %s3, %s3
          $region36: #{hypernetwork_forward.1} parent=32 // loop_header_branch
            %1328 = sbr.rel (%p1326) target = $region40
          $region37: #{hypernetwork_forward.1} parent=32 // loop_body
            %v1332 = vld [vmem:[%s1330] sm:$0xff]
            %1333 = vst [vmem:[%s1331] sm:$0xff] %v1332
            %v1334 = vld [vmem:[%s1330 + $0x8] sm:$0xff]
            %1335 = vst [vmem:[%s1331 + $0x8] sm:$0xff] %v1334
          $region38: #{hypernetwork_forward.1} parent=32 // loop_footer
            %s1329 = sadd.s32 1, %s1325
          $region39: #{hypernetwork_forward.1} parent=32 // loop_footer_branch
            %1324 = sbr.rel target = $region35
          $region40: #{hypernetwork_forward.1} parent=32 // loop_exit
            _
          %s1337 = ssub.s32 4, 1
          loop: start=0, step=1, limit=1
          $region41: #{hypernetwork_forward.1} parent=32 // loop_pre_header
            _
          $region42: #{hypernetwork_forward.1} parent=32 // loop_header
            %s1339 = sphi 0, %s1343
            %p1340 = scmp.ge.s32.totalorder %s1339, 1
            %s1344 = sphi %s1322, %s1322
            %s1345 = sphi %s1323, %s1323
          $region43: #{hypernetwork_forward.1} parent=32 // loop_header_branch
            %1342 = sbr.rel (%p1340) target = $region47
          $region44: #{hypernetwork_forward.1} parent=32 // loop_body
            %v1346 = vld [vmem:[%s1344] sm:%s1337]
            %1347 = vst [vmem:[%s1345] sm:%s1337] %v1346
          $region45: #{hypernetwork_forward.1} parent=32 // loop_footer
            %s1343 = sadd.s32 1, %s1339
          $region46: #{hypernetwork_forward.1} parent=32 // loop_footer_branch
            %1338 = sbr.rel target = $region42
          $region47: #{hypernetwork_forward.1} parent=32 // loop_exit
            _
        $region33: #{hypernetwork_forward.1} parent=28 // pred_fallthru
          _
      $region29: #{hypernetwork_forward.1} parent=24 // pred_fallthru
        _
      %1348 = vnop
    $region25: #{hypernetwork_forward.1} parent=1 // pred_fallthru
      _
    // Predicated region
    $region48: #{hypernetwork_forward.1} parent=1 // pred_check
      _
    $region49: #{hypernetwork_forward.1} parent=1 // pred_check_branch
      %1350 = sbr.rel (0) target = $region51
    $region50: #{hypernetwork_forward.1} parent=1 // pred_region
      _
    $region51: #{hypernetwork_forward.1} parent=1 // pred_fallthru
      _
    %1351 = vsyncpa [#allocation3], 1
    %1352 = vsyncpa [#allocation5], 1

</llo_original>
